<compile_context>
chip_gen: v6e
topology: v6e:2x2x1
jax: 0.10.0
libtpu: 0.0.40
codegen_flags: <defaults>
</compile_context>

<pallas_src>
import functools

import jax
import jax.numpy as jnp
from jax.experimental import pallas as pl
from jax.experimental.pallas import tpu as pltpu


NEG_INF = -1.0e30          # Python float: never captured as a jaxpr constant
ADJ_BIAS_SCALE = 128.0     # int8 {0,-128} * 128 -> {0, -16384}; exp(-16384) == 0 in f32


# ----------------------------------------------------------------------------
# Helpers
# ----------------------------------------------------------------------------
_VMEM_LIMIT_CACHE = None


def _vmem_limit_bytes():
    """Generation-aware VMEM limit: ~48 MiB on v7x (64 MiB phys), ~110 MiB on v5e/v6e (128 MiB)."""
    global _VMEM_LIMIT_CACHE
    if _VMEM_LIMIT_CACHE is None:
        cap = 64 << 20
        try:
            cap = int(pltpu.get_tpu_info().vmem_capacity_bytes)
        except Exception:
            pass
        _VMEM_LIMIT_CACHE = max(32 << 20, min(cap - (16 << 20), 110 << 20))
    return _VMEM_LIMIT_CACHE


def _pick_tile(n, max_tile):
    """Largest tile <= max_tile that divides n (whole-array block when n is small)."""
    if n <= max_tile:
        return n
    t = max_tile
    while t > 128 and n % t != 0:
        t //= 2
    return t if n % t == 0 else 128


def _round_up(x, m):
    return ((x + m - 1) // m) * m


# ----------------------------------------------------------------------------
# Kernel 1: shared linear projection + per-head attention coefficients
# ----------------------------------------------------------------------------
def gat_project_kernel(x_ref, wt_ref, almat_ref, armat_ref, xp_ref, alt_ref, ar_ref):
    """xp = x @ W^T (bf16 MXU, f32 acc); alpha via one small MXU matmul per side.

    x_ref:      [TN, Fin]   bf16
    wt_ref:     [Fin, H*C]  bf16 (W^T of the shared projection, lin_l == lin_r)
    almat_ref:  [H*C, HP]   f32 block-diagonal head-mix matrix for att_l
    armat_ref:  [H*C, HP]   f32 block-diagonal head-mix matrix for att_r
    xp_ref:     [TN, H*C]   bf16 projected features (out)
    alt_ref:    [HP, TN]    f32  alpha_l transposed, head-padded (out)
    ar_ref:     [TN, HP]    f32  alpha_r, head-padded (out)
    """
    xp = jnp.dot(x_ref[...], wt_ref[...], preferred_element_type=jnp.float32)   # [TN, H*C] f32
    xp_ref[...] = xp.astype(jnp.bfloat16)

    al = jnp.dot(xp, almat_ref[...], preferred_element_type=jnp.float32)        # [TN, HP]
    ar = jnp.dot(xp, armat_ref[...], preferred_element_type=jnp.float32)        # [TN, HP]
    alt_ref[...] = al.T                                                          # one small transpose / tile
    ar_ref[...] = ar


# ----------------------------------------------------------------------------
# Kernel 2: masked attention softmax (online over src tiles) + aggregation + ReLU
# ----------------------------------------------------------------------------
def gat_attend_kernel(ar_ref, alt_ref, xp_ref, adjb_ref, out_ref,
                      m_sc, l_sc, acc_sc, *, heads, out_ch, neg_slope):
    """Online-softmax GAT aggregation for one (dst_tile, src_tile) grid step.

    ar_ref:   [TN, HP]    alpha_r of destination tile (f32)
    alt_ref:  [HP, TK]    alpha_l^T of source tile (f32)
    xp_ref:   [TK, H*C]   projected source features (bf16)
    adjb_ref: [TN, TK]    int8 additive mask: 0 where edge j->i exists, -128 otherwise
    out_ref:  [TN, H*C]   layer output (written once on the last src tile)
    scratch:  m_sc/l_sc [TN, HP], acc_sc [TN, H*C] (f32)
    """
    k = pl.program_id(1)

    @pl.when(k == 0)
    def _():
        m_sc[...] = jnp.full_like(m_sc[...], NEG_INF)
        l_sc[...] = jnp.zeros_like(l_sc[...])
        acc_sc[...] = jnp.zeros_like(acc_sc[...])

    # Additive mask bias, decoded once per adj block (shared across heads).
    bias = adjb_ref[...].astype(jnp.float32) * ADJ_BIAS_SCALE        # 0 / -16384, [TN, TK]
    ar = ar_ref[...]                                                  # [TN, HP]
    alt = alt_ref[...]                                                # [HP, TK]
    xp = xp_ref[...]                                                  # [TK, H*C] bf16

    for h in range(heads):
        sl = slice(h * out_ch, (h + 1) * out_ch)
        # e(j->i) = leaky_relu(alpha_r[i,h] + alpha_l[j,h]) + mask bias
        logits = ar[:, h:h + 1] + alt[h:h + 1, :]                     # [TN, TK]
        logits = jnp.where(logits > 0, logits, neg_slope * logits) + bias

        m_h = m_sc[:, h:h + 1]
        m_new = jnp.maximum(m_h, jnp.max(logits, axis=-1, keepdims=True))
        corr = jnp.exp(m_h - m_new)
        p = jnp.exp(logits - m_new)                                   # masked entries underflow to 0

        l_sc[:, h:h + 1] = corr * l_sc[:, h:h + 1] + jnp.sum(p, axis=-1, keepdims=True)
        pv = jnp.dot(p.astype(jnp.bfloat16), xp[:, sl],
                     preferred_element_type=jnp.float32)              # [TN, C]
        acc_sc[:, sl] = corr * acc_sc[:, sl] + pv
        m_sc[:, h:h + 1] = m_new

    @pl.when(k == pl.num_programs(1) - 1)
    def _():
        inv = pl.reciprocal(jnp.maximum(l_sc[...], 1e-30), approx=True)   # [TN, HP]
        acc = acc_sc[...]                                                 # [TN, H*C]
        outs = []
        for h in range(heads):
            sl = slice(h * out_ch, (h + 1) * out_ch)
            outs.append(jnp.maximum(acc[:, sl] * inv[:, h:h + 1], 0.0))   # fused ReLU
        out_ref[...] = jnp.concatenate(outs, axis=-1)                     # one lane-dense store


# ----------------------------------------------------------------------------
# Kernel 3: post_mp (Linear -> Dropout(p=0) -> Linear) [+ log_softmax]
# ----------------------------------------------------------------------------
def post_mp_kernel(x_ref, w1t_ref, b1_ref, w2t_ref, b2_ref, out_ref, *, apply_log_softmax):
    h = jnp.dot(x_ref[...], w1t_ref[...], preferred_element_type=jnp.float32) + b1_ref[...]
    # nn.Dropout(p=0.0) is identity here.
    y = jnp.dot(h.astype(jnp.bfloat16), w2t_ref[...],
                preferred_element_type=jnp.float32) + b2_ref[...]
    if apply_log_softmax:
        m = jnp.max(y, axis=-1, keepdims=True)
        z = y - m
        lse = jnp.log(jnp.sum(jnp.exp(z), axis=-1, keepdims=True))
        out_ref[...] = z - lse
    else:
        out_ref[...] = y


# ----------------------------------------------------------------------------
# Wrappers around pallas_call
# ----------------------------------------------------------------------------
def gat_layer(x, wt_bf16, al_mat, ar_mat, adj_bias_i8, *, heads, out_ch,
              neg_slope=0.2, max_tile_dst=512, max_tile_src=1024):
    n, fin = x.shape
    hc = heads * out_ch
    hp = al_mat.shape[1]                       # padded head count (multiple of 8)
    vmem_limit = _vmem_limit_bytes()

    tile_p = _pick_tile(n, 512)                # projection row tile
    tile_dst = _pick_tile(n, max_tile_dst)     # attention dst tile
    tile_src = _pick_tile(n, max_tile_src)     # attention src tile
    assert n % tile_p == 0 and n % tile_dst == 0 and n % tile_src == 0

    x_bf = x.astype(jnp.bfloat16)

    xp, alt, ar = pl.pallas_call(
        gat_project_kernel,
        out_shape=(
            jax.ShapeDtypeStruct((n, hc), jnp.bfloat16),    # xp (bf16: halves re-read traffic)
            jax.ShapeDtypeStruct((hp, n), jnp.float32),     # alpha_l^T (head-padded, lane-dense)
            jax.ShapeDtypeStruct((n, hp), jnp.float32),     # alpha_r
        ),
        grid=(n // tile_p,),
        in_specs=[
            pl.BlockSpec((tile_p, fin), lambda i: (i, 0)),
            pl.BlockSpec((fin, hc), lambda i: (0, 0)),
            pl.BlockSpec((hc, hp), lambda i: (0, 0)),
            pl.BlockSpec((hc, hp), lambda i: (0, 0)),
        ],
        out_specs=(
            pl.BlockSpec((tile_p, hc), lambda i: (i, 0)),
            pl.BlockSpec((hp, tile_p), lambda i: (0, i)),
            pl.BlockSpec((tile_p, hp), lambda i: (i, 0)),
        ),
        compiler_params=pltpu.CompilerParams(
            dimension_semantics=("parallel",),
            vmem_limit_bytes=vmem_limit),
    )(x_bf, wt_bf16, al_mat, ar_mat)

    # Per-step VMEM at the largest tiling (TN=512, TK=1024, HC=64):
    #   adj int8 2x0.5MiB + xp bf16 2x128KiB + out 2x128KiB + alpha 2x(32+16)KiB + scratch ~160KiB
    #   ~= 1.8 MiB  -> far below every generation's limit; tiles are bounded by grid divisibility.
    return pl.pallas_call(
        functools.partial(gat_attend_kernel, heads=heads, out_ch=out_ch,
                          neg_slope=neg_slope),
        out_shape=jax.ShapeDtypeStruct((n, hc), jnp.float32),
        grid=(n // tile_dst, n // tile_src),
        in_specs=[
            pl.BlockSpec((tile_dst, hp), lambda i, k: (i, 0)),
            pl.BlockSpec((hp, tile_src), lambda i, k: (0, k)),
            pl.BlockSpec((tile_src, hc), lambda i, k: (k, 0)),
            pl.BlockSpec((tile_dst, tile_src), lambda i, k: (i, k)),
        ],
        out_specs=pl.BlockSpec((tile_dst, hc), lambda i, k: (i, 0)),
        scratch_shapes=[
            pltpu.VMEM((tile_dst, hp), jnp.float32),    # m
            pltpu.VMEM((tile_dst, hp), jnp.float32),    # l
            pltpu.VMEM((tile_dst, hc), jnp.float32),    # acc
        ],
        compiler_params=pltpu.CompilerParams(
            dimension_semantics=("parallel", "arbitrary"),
            vmem_limit_bytes=vmem_limit),
    )(ar, alt, xp, adj_bias_i8)


def post_mp(x, w1t, b1, w2t, b2, *, out_dim, apply_log_softmax=True,
            max_tile_rows=512, pad_classes=128):
    n, fin = x.shape
    hid = w1t.shape[1]
    tile_rows = _pick_tile(n, max_tile_rows)
    pad = pad_classes - out_dim
    vmem_limit = _vmem_limit_bytes()

    x_bf = x.astype(jnp.bfloat16)
    w1t_bf = w1t.astype(jnp.bfloat16)
    # pad the class dim to 128 lanes so the final store / lane reduce are full width
    w2t_p = jnp.concatenate([w2t, jnp.zeros((hid, pad), jnp.float32)], axis=1).astype(jnp.bfloat16)
    b2_p = jnp.concatenate([b2, jnp.full((1, pad), NEG_INF, jnp.float32)], axis=1)

    y = pl.pallas_call(
        functools.partial(post_mp_kernel, apply_log_softmax=apply_log_softmax),
        out_shape=jax.ShapeDtypeStruct((n, pad_classes), jnp.float32),
        grid=(n // tile_rows,),
        in_specs=[
            pl.BlockSpec((tile_rows, fin), lambda i: (i, 0)),
            pl.BlockSpec((fin, hid), lambda i: (0, 0)),
            pl.BlockSpec((1, hid), lambda i: (0, 0)),
            pl.BlockSpec((hid, pad_classes), lambda i: (0, 0)),
            pl.BlockSpec((1, pad_classes), lambda i: (0, 0)),
        ],
        out_specs=pl.BlockSpec((tile_rows, pad_classes), lambda i: (i, 0)),
        compiler_params=pltpu.CompilerParams(
            dimension_semantics=("parallel",),
            vmem_limit_bytes=vmem_limit),
    )(x_bf, w1t_bf, b1, w2t_p, b2_p)
    return y[:, :out_dim]


# ----------------------------------------------------------------------------
# Parameter construction (deterministic, in-script)
# ----------------------------------------------------------------------------
def xavier_uniform(key, shape, fan_in, fan_out):
    bound = (6.0 / (fan_in + fan_out)) ** 0.5
    return jax.random.uniform(key, shape, jnp.float32, -bound, bound)


def head_mix_matrix(att, heads, out_ch, heads_pad):
    """Block-diagonal matrix M [H*C, HP] with M[h*C+c, h] = att[h, c] (alpha = xp @ M)."""
    m = jnp.zeros((heads * out_ch, heads_pad), jnp.float32)
    for h in range(heads):
        m = m.at[h * out_ch:(h + 1) * out_ch, h].set(att[h])
    return m


def init_params(key, input_dim, hidden_dim, output_dim, heads, num_layers, heads_pad=8):
    params = {"convs": []}
    in_dim = input_dim
    hc = heads * hidden_dim
    for _ in range(num_layers):
        key, k1, k2, k3 = jax.random.split(key, 4)
        w = xavier_uniform(k1, (hc, in_dim), in_dim, hc)              # lin_l.weight (== lin_r)
        att_l = xavier_uniform(k2, (heads, hidden_dim), hidden_dim, hidden_dim)
        att_r = xavier_uniform(k3, (heads, hidden_dim), hidden_dim, hidden_dim)
        params["convs"].append({
            "Wt": w.T.astype(jnp.bfloat16),                            # [Fin, H*C] bf16 MXU operand
            "Al": head_mix_matrix(att_l, heads, hidden_dim, heads_pad),
            "Ar": head_mix_matrix(att_r, heads, hidden_dim, heads_pad),
        })
        in_dim = hc
    key, k1, k2, k3, k4 = jax.random.split(key, 5)
    params["W1t"] = xavier_uniform(k1, (hc, hidden_dim), hc, hidden_dim)
    params["b1"] = 0.01 * jax.random.normal(k2, (1, hidden_dim), jnp.float32)
    params["W2t"] = xavier_uniform(k3, (hidden_dim, output_dim), hidden_dim, output_dim)
    params["b2"] = 0.01 * jax.random.normal(k4, (1, output_dim), jnp.float32)
    return params


def gnn_stack_forward(params, x, adj_bias_i8, *, heads, hidden_dim, output_dim,
                      num_layers, emb=False):
    for l in range(num_layers):
        c = params["convs"][l]
        # GATConv + ReLU fused in-kernel; F.dropout(p=0.0) is identity.
        x = gat_layer(x, c["Wt"], c["Al"], c["Ar"], adj_bias_i8,
                      heads=heads, out_ch=hidden_dim)
    # post_mp: Linear -> Dropout(0.0) -> Linear; log_softmax only when emb=False
    return post_mp(x, params["W1t"], params["b1"], params["W2t"], params["b2"],
                   out_dim=output_dim, apply_log_softmax=not emb)


# ----------------------------------------------------------------------------
# Main
# ----------------------------------------------------------------------------
if __name__ == "__main__":
    # Hyperparameters implied by GNNStack(__init__) / args
    INPUT_DIM = 16
    HIDDEN_DIM = 32
    OUTPUT_DIM = 8
    HEADS = 2
    NUM_LAYERS = 2
    N_NODES = 256            # small; the attention runs as a single VMEM-resident block here

    key = jax.random.PRNGKey(0)
    key, kx = jax.random.split(key)

    # data.x
    x = jax.random.normal(kx, (N_NODES, INPUT_DIM), jnp.float32)

    # data.edge_index: self loops + ring (both directions) so every node has in-edges
    src, dst = [], []
    for i in range(N_NODES):
        src += [i, i, (i + 1) % N_NODES]
        dst += [i, (i + 1) % N_NODES, i]
    edge_index = jnp.array([src, dst], dtype=jnp.int32)   # [2, E], row0=source, row1=target

    # additive-bias adjacency in int8: 0 where edge j->i exists, -128 otherwise
    adj_mask = jnp.zeros((N_NODES, N_NODES), jnp.float32).at[
        edge_index[1], edge_index[0]].set(1.0)
    adj_bias_i8 = ((adj_mask - 1.0) * 128.0).astype(jnp.int8)

    params = init_params(key, INPUT_DIM, HIDDEN_DIM, OUTPUT_DIM, HEADS, NUM_LAYERS)

    out = gnn_stack_forward(params, x, adj_bias_i8, heads=HEADS, hidden_dim=HIDDEN_DIM,
                            output_dim=OUTPUT_DIM, num_layers=NUM_LAYERS, emb=False)
    out = jax.block_until_ready(out)

    assert out.shape == (N_NODES, OUTPUT_DIM)
    assert bool(jnp.all(jnp.isfinite(out)))
    # log_softmax rows should exponentiate to ~1
    row_sums = jnp.sum(jnp.exp(out), axis=1)
    assert bool(jnp.all(jnp.abs(row_sums - 1.0) < 1e-4))

    print("KERNEL_OK")
</pallas_src>

<mosaic_0001>
module attributes {stable_mosaic.version = 11 : i64} {
  func.func @gat_project_kernel(%arg0: i32, %arg1: memref<256x16xbf16, #tpu.memory_space<vmem>>, %arg2: memref<16x64xbf16, #tpu.memory_space<vmem>>, %arg3: memref<64x8xf32, #tpu.memory_space<vmem>>, %arg4: memref<64x8xf32, #tpu.memory_space<vmem>>, %arg5: memref<256x64xbf16, #tpu.memory_space<vmem>>, %arg6: memref<8x256xf32, #tpu.memory_space<vmem>>, %arg7: memref<256x8xf32, #tpu.memory_space<vmem>>) attributes {dimension_semantics = [#tpu.dimension_semantics<parallel>], iteration_bounds = array<i64: 1>, scalar_prefetch = 0 : i64, scratch_operands = 0 : i64, tpu.core_type = #tpu.core_type<tc>, window_params = [{transform_indices = @transform_0, window_bounds = array<i64: 256, 16>}, {pipeline_mode = #tpu.pipeline_mode<synchronous>, transform_indices = @transform_1, window_bounds = array<i64: 16, 64>}, {pipeline_mode = #tpu.pipeline_mode<synchronous>, transform_indices = @transform_2, window_bounds = array<i64: 64, 8>}, {pipeline_mode = #tpu.pipeline_mode<synchronous>, transform_indices = @transform_3, window_bounds = array<i64: 64, 8>}, {transform_indices = @transform_4, window_bounds = array<i64: 256, 64>}, {transform_indices = @transform_5, window_bounds = array<i64: 8, 256>}, {transform_indices = @transform_6, window_bounds = array<i64: 256, 8>}]} {
    %c0 = arith.constant 0 : index
    %c0_0 = arith.constant 0 : index
    %0 = vector.load %arg1[%c0, %c0_0] : memref<256x16xbf16, #tpu.memory_space<vmem>>, vector<256x16xbf16>
    %c0_1 = arith.constant 0 : index
    %c0_2 = arith.constant 0 : index
    %1 = vector.load %arg2[%c0_1, %c0_2] : memref<16x64xbf16, #tpu.memory_space<vmem>>, vector<16x64xbf16>
    %cst = arith.constant dense<0.000000e+00> : vector<256x64xf32>
    %2 = tpu.matmul %0, %1, %cst {dimension_numbers = #tpu.dot_dimension_numbers<[1], [0], [0], [1], [0, 0, 1, 1], [], []>} : vector<256x16xbf16>, vector<16x64xbf16>, vector<256x64xf32> -> vector<256x64xf32>
    %3 = arith.truncf %2 : vector<256x64xf32> to vector<256x64xbf16>
    %c0_3 = arith.constant 0 : index
    %c0_4 = arith.constant 0 : index
    %4 = vector.load %arg5[%c0_3, %c0_4] : memref<256x64xbf16, #tpu.memory_space<vmem>>, vector<256x64xbf16>
    tpu.vector_store %arg5[%c0_3, %c0_4], %3 {strides = array<i32>} : memref<256x64xbf16, #tpu.memory_space<vmem>>, vector<256x64xbf16>,
    %c0_5 = arith.constant 0 : index
    %c0_6 = arith.constant 0 : index
    %5 = vector.load %arg3[%c0_5, %c0_6] : memref<64x8xf32, #tpu.memory_space<vmem>>, vector<64x8xf32>
    %cst_7 = arith.constant dense<0.000000e+00> : vector<256x8xf32>
    %6 = tpu.matmul %2, %5, %cst_7 {dimension_numbers = #tpu.dot_dimension_numbers<[1], [0], [0], [1], [0, 0, 1, 1], [], []>} : vector<256x64xf32>, vector<64x8xf32>, vector<256x8xf32> -> vector<256x8xf32>
    %c0_8 = arith.constant 0 : index
    %c0_9 = arith.constant 0 : index
    %7 = vector.load %arg4[%c0_8, %c0_9] : memref<64x8xf32, #tpu.memory_space<vmem>>, vector<64x8xf32>
    %cst_10 = arith.constant dense<0.000000e+00> : vector<256x8xf32>
    %8 = tpu.matmul %2, %7, %cst_10 {dimension_numbers = #tpu.dot_dimension_numbers<[1], [0], [0], [1], [0, 0, 1, 1], [], []>} : vector<256x64xf32>, vector<64x8xf32>, vector<256x8xf32> -> vector<256x8xf32>
    %9 = tpu.transpose %6, [1, 0] : vector<256x8xf32> -> vector<8x256xf32>
    %c0_11 = arith.constant 0 : index
    %c0_12 = arith.constant 0 : index
    %10 = vector.load %arg6[%c0_11, %c0_12] : memref<8x256xf32, #tpu.memory_space<vmem>>, vector<8x256xf32>
    tpu.vector_store %arg6[%c0_11, %c0_12], %9 {strides = array<i32>} : memref<8x256xf32, #tpu.memory_space<vmem>>, vector<8x256xf32>,
    %c0_13 = arith.constant 0 : index
    %c0_14 = arith.constant 0 : index
    %11 = vector.load %arg7[%c0_13, %c0_14] : memref<256x8xf32, #tpu.memory_space<vmem>>, vector<256x8xf32>
    tpu.vector_store %arg7[%c0_13, %c0_14], %8 {strides = array<i32>} : memref<256x8xf32, #tpu.memory_space<vmem>>, vector<256x8xf32>,
    return
  }
  func.func @transform_0(%arg0: i32) -> (i32, i32) {
    %c0_i32 = arith.constant 0 : i32
    %c0_i32_0 = arith.constant 0 : i32
    return %arg0, %c0_i32 : i32, i32
  }
  func.func @transform_1(%arg0: i32) -> (i32, i32) {
    %c0_i32 = arith.constant 0 : i32
    %c0_i32_0 = arith.constant 0 : i32
    %c0_i32_1 = arith.constant 0 : i32
    return %c0_i32, %c0_i32_0 : i32, i32
  }
  func.func @transform_2(%arg0: i32) -> (i32, i32) {
    %c0_i32 = arith.constant 0 : i32
    %c0_i32_0 = arith.constant 0 : i32
    %c0_i32_1 = arith.constant 0 : i32
    return %c0_i32, %c0_i32_0 : i32, i32
  }
  func.func @transform_3(%arg0: i32) -> (i32, i32) {
    %c0_i32 = arith.constant 0 : i32
    %c0_i32_0 = arith.constant 0 : i32
    %c0_i32_1 = arith.constant 0 : i32
    return %c0_i32, %c0_i32_0 : i32, i32
  }
  func.func @transform_4(%arg0: i32) -> (i32, i32) {
    %c0_i32 = arith.constant 0 : i32
    %c0_i32_0 = arith.constant 0 : i32
    return %arg0, %c0_i32 : i32, i32
  }
  func.func @transform_5(%arg0: i32) -> (i32, i32) {
    %c0_i32 = arith.constant 0 : i32
    %c0_i32_0 = arith.constant 0 : i32
    return %c0_i32, %arg0 : i32, i32
  }
  func.func @transform_6(%arg0: i32) -> (i32, i32) {
    %c0_i32 = arith.constant 0 : i32
    %c0_i32_0 = arith.constant 0 : i32
    return %arg0, %c0_i32 : i32, i32
  }
}

</mosaic_0001>

<llo_original>
// kernel: tpu_custom_call.1
$region0: #{tpu_custom_call.1}
  #allocation0 [shape = 'u32[]', space=smem, size = 0x4, offset = 0x4, fixed_abs, tag = 'smem constant byte address 0x4 - core index']
  #allocation1 [shape = 'u32[144,128]{1,0:T(1,128)}', space=vmem, size = 0x12000, scoped, tag = 'internal scratch']
  %s0 = inlined_call_operand.vmem [shape: bf16[256,16], index: 0, kind: input, shape index: {}]
  %s1 = inlined_call_operand.vmem [shape: bf16[16,64], index: 1, kind: input, shape index: {}]
  %s2 = inlined_call_operand.vmem [shape: f32[64,8], index: 2, kind: input, shape index: {}]
  %s3 = inlined_call_operand.vmem [shape: f32[64,8], index: 3, kind: input, shape index: {}]
  %s4 = inlined_call_operand.vmem [shape: bf16[256,64], index: 4, kind: output, shape index: {0}]
  %s5 = inlined_call_operand.hbm [shape: f32[8,256], index: 5, kind: output, shape index: {1}]
  %s6 = inlined_call_operand.vmem [shape: f32[256,8], index: 6, kind: output, shape index: {2}]
  %7 = xla_tuple %s4, %s5, %s6
  %s8 = sld [smem:[#allocation0]]
  $region42: #{tpu_custom_call.1} parent=0
    _
  %s10 = ssub.s32 1, %s8
  %s11 = scalar_select 0, %s10, %s8
  $region1: #{tpu_custom_call.1} parent=0
    #allocation2 [shape = 'u8[8192]{0}', space=vmem, size = 0x2000, scoped, tag = 'output window, operand 1, single buffered']
    #allocation3 [shape = 's32[1]{0}', space=sflag, size = 0x4, scoped, tag = 'scoped memory for tpu_custom_call.1']
    %12 = vsyncpa [#allocation3], 0
    // Predicated region
    $region2: #{tpu_custom_call.1} parent=1 // pred_check
      _
    $region3: #{tpu_custom_call.1} parent=1 // pred_check_branch
      %14 = sbr.rel (0) target = $region5
    $region4: #{tpu_custom_call.1} parent=1 // pred_region
      _
    $region5: #{tpu_custom_call.1} parent=1 // pred_fallthru
      _
    // Predicated region
    $region6: #{tpu_custom_call.1} parent=1 // pred_check
      _
    $region7: #{tpu_custom_call.1} parent=1 // pred_check_branch
      %16 = sbr.rel (0) target = $region9
    $region8: #{tpu_custom_call.1} parent=1 // pred_region
      _
    $region9: #{tpu_custom_call.1} parent=1 // pred_fallthru
      _
    // Predicated region
    $region10: #{tpu_custom_call.1} parent=1 // pred_check
      _
    $region11: #{tpu_custom_call.1} parent=1 // pred_check_branch
      %18 = sbr.rel (0) target = $region13
    $region12: #{tpu_custom_call.1} parent=1 // pred_region
      _
    $region13: #{tpu_custom_call.1} parent=1 // pred_fallthru
      _
    // Predicated region
    $region14: #{tpu_custom_call.1} parent=1 // pred_check
      _
    $region15: #{tpu_custom_call.1} parent=1 // pred_check_branch
      %20 = sbr.rel (0) target = $region17
    $region16: #{tpu_custom_call.1} parent=1 // pred_region
      _
    $region17: #{tpu_custom_call.1} parent=1 // pred_fallthru
      _
    %v22 = vld [vmem:[%s0] sm:$0xf]
    %v23 = vld [vmem:[%s0 + $0x4] sm:$0xf]
    %v24 = vld [vmem:[%s0 + $0x8] sm:$0xf]
    %v25 = vld [vmem:[%s0 + $0xc] sm:$0xf]
    %v26 = vld [vmem:[%s0 + $0x10] sm:$0xf]
    %v27 = vld [vmem:[%s0 + $0x14] sm:$0xf]
    %v28 = vld [vmem:[%s0 + $0x18] sm:$0xf]
    %v29 = vld [vmem:[%s0 + $0x1c] sm:$0xf]
    %v30 = vld [vmem:[%s0 + $0x20] sm:$0xf]
    %v31 = vld [vmem:[%s0 + $0x24] sm:$0xf]
    %v32 = vld [vmem:[%s0 + $0x28] sm:$0xf]
    %v33 = vld [vmem:[%s0 + $0x2c] sm:$0xf]
    %v34 = vld [vmem:[%s0 + $0x30] sm:$0xf]
    %v35 = vld [vmem:[%s0 + $0x34] sm:$0xf]
    %v36 = vld [vmem:[%s0 + $0x38] sm:$0xf]
    %v37 = vld [vmem:[%s0 + $0x3c] sm:$0xf]
    %v38 = vld [vmem:[%s0 + $0x40] sm:$0xf]
    %v39 = vld [vmem:[%s0 + $0x44] sm:$0xf]
    %v40 = vld [vmem:[%s0 + $0x48] sm:$0xf]
    %v41 = vld [vmem:[%s0 + $0x4c] sm:$0xf]
    %v42 = vld [vmem:[%s0 + $0x50] sm:$0xf]
    %v43 = vld [vmem:[%s0 + $0x54] sm:$0xf]
    %v44 = vld [vmem:[%s0 + $0x58] sm:$0xf]
    %v45 = vld [vmem:[%s0 + $0x5c] sm:$0xf]
    %v46 = vld [vmem:[%s0 + $0x60] sm:$0xf]
    %v47 = vld [vmem:[%s0 + $0x64] sm:$0xf]
    %v48 = vld [vmem:[%s0 + $0x68] sm:$0xf]
    %v49 = vld [vmem:[%s0 + $0x6c] sm:$0xf]
    %v50 = vld [vmem:[%s0 + $0x70] sm:$0xf]
    %v51 = vld [vmem:[%s0 + $0x74] sm:$0xf]
    %v52 = vld [vmem:[%s0 + $0x78] sm:$0xf]
    %v53 = vld [vmem:[%s0 + $0x7c] sm:$0xf]
    %v54 = vld [vmem:[%s1] sm:$0xf]
    %v55 = vld [vmem:[%s1 + $0x4] sm:$0xf]
    %v88 = vunpack.c.l.b16 %v22
    %v89 = vunpack.c.l.b16 %v23
    %v90 = vunpack.c.l.b16 %v24
    %v91 = vunpack.c.l.b16 %v25
    %v92 = vunpack.c.l.b16 %v26
    %v93 = vunpack.c.l.b16 %v27
    %v94 = vunpack.c.l.b16 %v28
    %v95 = vunpack.c.l.b16 %v29
    %v96 = vunpack.c.l.b16 %v30
    %v97 = vunpack.c.l.b16 %v31
    %v98 = vunpack.c.l.b16 %v32
    %v99 = vunpack.c.l.b16 %v33
    %v100 = vunpack.c.l.b16 %v34
    %v101 = vunpack.c.l.b16 %v35
    %v102 = vunpack.c.l.b16 %v36
    %v103 = vunpack.c.l.b16 %v37
    %v104 = vunpack.c.l.b16 %v38
    %v105 = vunpack.c.l.b16 %v39
    %v106 = vunpack.c.l.b16 %v40
    %v107 = vunpack.c.l.b16 %v41
    %v108 = vunpack.c.l.b16 %v42
    %v109 = vunpack.c.l.b16 %v43
    %v110 = vunpack.c.l.b16 %v44
    %v111 = vunpack.c.l.b16 %v45
    %v112 = vunpack.c.l.b16 %v46
    %v113 = vunpack.c.l.b16 %v47
    %v114 = vunpack.c.l.b16 %v48
    %v115 = vunpack.c.l.b16 %v49
    %v116 = vunpack.c.l.b16 %v50
    %v117 = vunpack.c.l.b16 %v51
    %v118 = vunpack.c.l.b16 %v52
    %v119 = vunpack.c.l.b16 %v53
    %v120 = vpack.c.b16 %v89, %v88
    %v121 = vpack.c.b16 %v91, %v90
    %v122 = vpack.c.b16 %v93, %v92
    %v123 = vpack.c.b16 %v95, %v94
    %v124 = vpack.c.b16 %v97, %v96
    %v125 = vpack.c.b16 %v99, %v98
    %v126 = vpack.c.b16 %v101, %v100
    %v127 = vpack.c.b16 %v103, %v102
    %v128 = vpack.c.b16 %v105, %v104
    %v129 = vpack.c.b16 %v107, %v106
    %v130 = vpack.c.b16 %v109, %v108
    %v131 = vpack.c.b16 %v111, %v110
    %v132 = vpack.c.b16 %v113, %v112
    %v133 = vpack.c.b16 %v115, %v114
    %v134 = vpack.c.b16 %v117, %v116
    %v135 = vpack.c.b16 %v119, %v118
    %v138 = vunpack.c.l.b16 %v54
    %v139 = vunpack.c.l.b16 %v55
    %v140 = vpack.c.b16 %v139, %v138
    %vm142 = vcmask 130048
    %v144 = vsel %vm142, %v120, 0
    %v147 = vsel %vm142, %v121, 0
    %v150 = vsel %vm142, %v122, 0
    %v153 = vsel %vm142, %v123, 0
    %v156 = vsel %vm142, %v124, 0
    %v159 = vsel %vm142, %v125, 0
    %v162 = vsel %vm142, %v126, 0
    %v165 = vsel %vm142, %v127, 0
    %v168 = vsel %vm142, %v128, 0
    %v171 = vsel %vm142, %v129, 0
    %v174 = vsel %vm142, %v130, 0
    %v177 = vsel %vm142, %v131, 0
    %v180 = vsel %vm142, %v132, 0
    %v183 = vsel %vm142, %v133, 0
    %v186 = vsel %vm142, %v134, 0
    %v189 = vsel %vm142, %v135, 0
    %191 = vmatprep.subr.bf16.mxu0 0
    %192 = vmatpush1.bf16.msra.mxu0 0
    %193 = vmatprep.subr.bf16.mxu0 0
    %194 = vmatpush1.bf16.msra.mxu0 0
    %195 = vmatprep.subr.bf16.mxu0 0
    %196 = vmatpush1.bf16.msra.mxu0 0
    %197 = vmatprep.subr.bf16.mxu0 0
    %198 = vmatpush1.bf16.msra.mxu0 0
    %199 = vmatprep.subr.bf16.mxu0 0
    %200 = vmatpush1.bf16.msra.mxu0 0
    %201 = vmatprep.subr.bf16.mxu0 0
    %202 = vmatpush1.bf16.msra.mxu0 0
    %203 = vmatprep.subr.bf16.mxu0 0
    %204 = vmatpush1.bf16.msra.mxu0 0
    %205 = vmatprep.subr.bf16.mxu0 0
    %206 = vmatpush1.bf16.msra.mxu0 %v140
    %207 = vmatprep.subr.bf16.mxu0 0
    %208 = vmatpush2.bf16.msra.mxu0 0
    %209 = vmatprep.subr.bf16.mxu0 0
    %210 = vmatpush2.bf16.msra.mxu0 0
    %211 = vmatprep.subr.bf16.mxu0 0
    %212 = vmatpush2.bf16.msra.mxu0 0
    %213 = vmatprep.subr.bf16.mxu0 0
    %214 = vmatpush2.bf16.msra.mxu0 0
    %215 = vmatprep.subr.bf16.mxu0 0
    %216 = vmatpush2.bf16.msra.mxu0 0
    %217 = vmatprep.subr.bf16.mxu0 0
    %218 = vmatpush2.bf16.msra.mxu0 0
    %219 = vmatprep.subr.bf16.mxu0 0
    %220 = vmatpush2.bf16.msra.mxu0 0
    %221 = vmatprep.subr.bf16.mxu0 0
    %222 = vmatpush2.bf16.msra.mxu0 0
    %223 = vmatprep.mubr.bf16.mxu0 0
    %224 = vmatmul.mubr.bf16.gmra.mxu0 %v144
    %v225 = vpop.f32.mrf.mxu0
    %v226 = vadd.f32 0.0, %v225
    %v227 = vpop.f32.mrf.mxu0
    %v228 = vpop.f32.mrf.mxu0
    %v229 = vadd.f32 0.0, %v228
    %v230 = vpop.f32.mrf.mxu0
    %231 = vmatprep.mubr.bf16.mxu0 0
    %232 = vmatmul.mubr.bf16.gmra.mxu0 %v147
    %v233 = vpop.f32.mrf.mxu0
    %v234 = vadd.f32 0.0, %v233
    %v235 = vpop.f32.mrf.mxu0
    %v236 = vpop.f32.mrf.mxu0
    %v237 = vadd.f32 0.0, %v236
    %v238 = vpop.f32.mrf.mxu0
    %239 = vmatprep.mubr.bf16.mxu0 0
    %240 = vmatmul.mubr.bf16.gmra.mxu0 %v150
    %v241 = vpop.f32.mrf.mxu0
    %v242 = vadd.f32 0.0, %v241
    %v243 = vpop.f32.mrf.mxu0
    %v244 = vpop.f32.mrf.mxu0
    %v245 = vadd.f32 0.0, %v244
    %v246 = vpop.f32.mrf.mxu0
    %247 = vmatprep.mubr.bf16.mxu0 0
    %248 = vmatmul.mubr.bf16.gmra.mxu0 %v153
    %v249 = vpop.f32.mrf.mxu0
    %v250 = vadd.f32 0.0, %v249
    %v251 = vpop.f32.mrf.mxu0
    %v252 = vpop.f32.mrf.mxu0
    %v253 = vadd.f32 0.0, %v252
    %v254 = vpop.f32.mrf.mxu0
    %255 = vmatprep.mubr.bf16.mxu0 0
    %256 = vmatmul.mubr.bf16.gmra.mxu0 %v156
    %v257 = vpop.f32.mrf.mxu0
    %v258 = vadd.f32 0.0, %v257
    %v259 = vpop.f32.mrf.mxu0
    %v260 = vpop.f32.mrf.mxu0
    %v261 = vadd.f32 0.0, %v260
    %v262 = vpop.f32.mrf.mxu0
    %263 = vmatprep.mubr.bf16.mxu0 0
    %264 = vmatmul.mubr.bf16.gmra.mxu0 %v159
    %v265 = vpop.f32.mrf.mxu0
    %v266 = vadd.f32 0.0, %v265
    %v267 = vpop.f32.mrf.mxu0
    %v268 = vpop.f32.mrf.mxu0
    %v269 = vadd.f32 0.0, %v268
    %v270 = vpop.f32.mrf.mxu0
    %271 = vmatprep.mubr.bf16.mxu0 0
    %272 = vmatmul.mubr.bf16.gmra.mxu0 %v162
    %v273 = vpop.f32.mrf.mxu0
    %v274 = vadd.f32 0.0, %v273
    %v275 = vpop.f32.mrf.mxu0
    %v276 = vpop.f32.mrf.mxu0
    %v277 = vadd.f32 0.0, %v276
    %v278 = vpop.f32.mrf.mxu0
    %279 = vmatprep.mubr.bf16.mxu0 0
    %280 = vmatmul.mubr.bf16.gmra.mxu0 %v165
    %v281 = vpop.f32.mrf.mxu0
    %v282 = vadd.f32 0.0, %v281
    %v283 = vpop.f32.mrf.mxu0
    %v284 = vpop.f32.mrf.mxu0
    %v285 = vadd.f32 0.0, %v284
    %v286 = vpop.f32.mrf.mxu0
    %287 = vmatprep.mubr.bf16.mxu0 0
    %288 = vmatmul.mubr.bf16.gmra.mxu0 %v168
    %v289 = vpop.f32.mrf.mxu0
    %v290 = vadd.f32 0.0, %v289
    %v291 = vpop.f32.mrf.mxu0
    %v292 = vpop.f32.mrf.mxu0
    %v293 = vadd.f32 0.0, %v292
    %v294 = vpop.f32.mrf.mxu0
    %295 = vmatprep.mubr.bf16.mxu0 0
    %296 = vmatmul.mubr.bf16.gmra.mxu0 %v171
    %v297 = vpop.f32.mrf.mxu0
    %v298 = vadd.f32 0.0, %v297
    %v299 = vpop.f32.mrf.mxu0
    %v300 = vpop.f32.mrf.mxu0
    %v301 = vadd.f32 0.0, %v300
    %v302 = vpop.f32.mrf.mxu0
    %303 = vmatprep.mubr.bf16.mxu0 0
    %304 = vmatmul.mubr.bf16.gmra.mxu0 %v174
    %v305 = vpop.f32.mrf.mxu0
    %v306 = vadd.f32 0.0, %v305
    %v307 = vpop.f32.mrf.mxu0
    %v308 = vpop.f32.mrf.mxu0
    %v309 = vadd.f32 0.0, %v308
    %v310 = vpop.f32.mrf.mxu0
    %311 = vmatprep.mubr.bf16.mxu0 0
    %312 = vmatmul.mubr.bf16.gmra.mxu0 %v177
    %v313 = vpop.f32.mrf.mxu0
    %v314 = vadd.f32 0.0, %v313
    %v315 = vpop.f32.mrf.mxu0
    %v316 = vpop.f32.mrf.mxu0
    %v317 = vadd.f32 0.0, %v316
    %v318 = vpop.f32.mrf.mxu0
    %319 = vmatprep.mubr.bf16.mxu0 0
    %320 = vmatmul.mubr.bf16.gmra.mxu0 %v180
    %v321 = vpop.f32.mrf.mxu0
    %v322 = vadd.f32 0.0, %v321
    %v323 = vpop.f32.mrf.mxu0
    %v324 = vpop.f32.mrf.mxu0
    %v325 = vadd.f32 0.0, %v324
    %v326 = vpop.f32.mrf.mxu0
    %327 = vmatprep.mubr.bf16.mxu0 0
    %328 = vmatmul.mubr.bf16.gmra.mxu0 %v183
    %v329 = vpop.f32.mrf.mxu0
    %v330 = vadd.f32 0.0, %v329
    %v331 = vpop.f32.mrf.mxu0
    %v332 = vpop.f32.mrf.mxu0
    %v333 = vadd.f32 0.0, %v332
    %v334 = vpop.f32.mrf.mxu0
    %335 = vmatprep.mubr.bf16.mxu0 0
    %336 = vmatmul.mubr.bf16.gmra.mxu0 %v186
    %v337 = vpop.f32.mrf.mxu0
    %v338 = vadd.f32 0.0, %v337
    %v339 = vpop.f32.mrf.mxu0
    %v340 = vpop.f32.mrf.mxu0
    %v341 = vadd.f32 0.0, %v340
    %v342 = vpop.f32.mrf.mxu0
    %343 = vmatprep.mubr.bf16.mxu0 0
    %344 = vmatmul.mubr.bf16.gmra.mxu0 %v189
    %v345 = vpop.f32.mrf.mxu0
    %v346 = vadd.f32 0.0, %v345
    %v347 = vpop.f32.mrf.mxu0
    %v348 = vpop.f32.mrf.mxu0
    %v349 = vadd.f32 0.0, %v348
    %v350 = vpop.f32.mrf.mxu0
    %351 = vdwg.mxu0
    %v352 = vpack.c.bf16 %v229, %v226
    %v353 = vpack.c.bf16 %v237, %v234
    %v354 = vpack.c.bf16 %v245, %v242
    %v355 = vpack.c.bf16 %v253, %v250
    %v356 = vpack.c.bf16 %v261, %v258
    %v357 = vpack.c.bf16 %v269, %v266
    %v358 = vpack.c.bf16 %v277, %v274
    %v359 = vpack.c.bf16 %v285, %v282
    %v360 = vpack.c.bf16 %v293, %v290
    %v361 = vpack.c.bf16 %v301, %v298
    %v362 = vpack.c.bf16 %v309, %v306
    %v363 = vpack.c.bf16 %v317, %v314
    %v364 = vpack.c.bf16 %v325, %v322
    %v365 = vpack.c.bf16 %v333, %v330
    %v366 = vpack.c.bf16 %v341, %v338
    %v367 = vpack.c.bf16 %v349, %v346
    %v384 = vunpack.c.l.b16 %v352
    %v385 = vunpack.c.h.b16 %v352
    %v386 = vunpack.c.l.b16 %v353
    %v387 = vunpack.c.h.b16 %v353
    %v388 = vunpack.c.l.b16 %v354
    %v389 = vunpack.c.h.b16 %v354
    %v390 = vunpack.c.l.b16 %v355
    %v391 = vunpack.c.h.b16 %v355
    %v392 = vunpack.c.l.b16 %v356
    %v393 = vunpack.c.h.b16 %v356
    %v394 = vunpack.c.l.b16 %v357
    %v395 = vunpack.c.h.b16 %v357
    %v396 = vunpack.c.l.b16 %v358
    %v397 = vunpack.c.h.b16 %v358
    %v398 = vunpack.c.l.b16 %v359
    %v399 = vunpack.c.h.b16 %v359
    %v400 = vunpack.c.l.b16 %v360
    %v401 = vunpack.c.h.b16 %v360
    %v402 = vunpack.c.l.b16 %v361
    %v403 = vunpack.c.h.b16 %v361
    %v404 = vunpack.c.l.b16 %v362
    %v405 = vunpack.c.h.b16 %v362
    %v406 = vunpack.c.l.b16 %v363
    %v407 = vunpack.c.h.b16 %v363
    %v408 = vunpack.c.l.b16 %v364
    %v409 = vunpack.c.h.b16 %v364
    %v410 = vunpack.c.l.b16 %v365
    %v411 = vunpack.c.h.b16 %v365
    %v412 = vunpack.c.l.b16 %v366
    %v413 = vunpack.c.h.b16 %v366
    %v414 = vunpack.c.l.b16 %v367
    %v415 = vunpack.c.h.b16 %v367
    %v416 = vpack.c.b16 %v384, %v384
    %v417 = vpack.c.b16 %v385, %v385
    %v418 = vpack.c.b16 %v386, %v386
    %v419 = vpack.c.b16 %v387, %v387
    %v420 = vpack.c.b16 %v388, %v388
    %v421 = vpack.c.b16 %v389, %v389
    %v422 = vpack.c.b16 %v390, %v390
    %v423 = vpack.c.b16 %v391, %v391
    %v424 = vpack.c.b16 %v392, %v392
    %v425 = vpack.c.b16 %v393, %v393
    %v426 = vpack.c.b16 %v394, %v394
    %v427 = vpack.c.b16 %v395, %v395
    %v428 = vpack.c.b16 %v396, %v396
    %v429 = vpack.c.b16 %v397, %v397
    %v430 = vpack.c.b16 %v398, %v398
    %v431 = vpack.c.b16 %v399, %v399
    %v432 = vpack.c.b16 %v400, %v400
    %v433 = vpack.c.b16 %v401, %v401
    %v434 = vpack.c.b16 %v402, %v402
    %v435 = vpack.c.b16 %v403, %v403
    %v436 = vpack.c.b16 %v404, %v404
    %v437 = vpack.c.b16 %v405, %v405
    %v438 = vpack.c.b16 %v406, %v406
    %v439 = vpack.c.b16 %v407, %v407
    %v440 = vpack.c.b16 %v408, %v408
    %v441 = vpack.c.b16 %v409, %v409
    %v442 = vpack.c.b16 %v410, %v410
    %v443 = vpack.c.b16 %v411, %v411
    %v444 = vpack.c.b16 %v412, %v412
    %v445 = vpack.c.b16 %v413, %v413
    %v446 = vpack.c.b16 %v414, %v414
    %v447 = vpack.c.b16 %v415, %v415
    %vm480 = vcmask 519168
    %481 = vst.msk [vmem:[%s4] sm:$0xf] %vm480, %v416
    %482 = vst.msk [vmem:[%s4 + $0x4] sm:$0xf] %vm480, %v417
    %483 = vst.msk [vmem:[%s4 + $0x8] sm:$0xf] %vm480, %v418
    %484 = vst.msk [vmem:[%s4 + $0xc] sm:$0xf] %vm480, %v419
    %485 = vst.msk [vmem:[%s4 + $0x10] sm:$0xf] %vm480, %v420
    %486 = vst.msk [vmem:[%s4 + $0x14] sm:$0xf] %vm480, %v421
    %487 = vst.msk [vmem:[%s4 + $0x18] sm:$0xf] %vm480, %v422
    %488 = vst.msk [vmem:[%s4 + $0x1c] sm:$0xf] %vm480, %v423
    %489 = vst.msk [vmem:[%s4 + $0x20] sm:$0xf] %vm480, %v424
    %490 = vst.msk [vmem:[%s4 + $0x24] sm:$0xf] %vm480, %v425
    %491 = vst.msk [vmem:[%s4 + $0x28] sm:$0xf] %vm480, %v426
    %492 = vst.msk [vmem:[%s4 + $0x2c] sm:$0xf] %vm480, %v427
    %493 = vst.msk [vmem:[%s4 + $0x30] sm:$0xf] %vm480, %v428
    %494 = vst.msk [vmem:[%s4 + $0x34] sm:$0xf] %vm480, %v429
    %495 = vst.msk [vmem:[%s4 + $0x38] sm:$0xf] %vm480, %v430
    %496 = vst.msk [vmem:[%s4 + $0x3c] sm:$0xf] %vm480, %v431
    %497 = vst.msk [vmem:[%s4 + $0x40] sm:$0xf] %vm480, %v432
    %498 = vst.msk [vmem:[%s4 + $0x44] sm:$0xf] %vm480, %v433
    %499 = vst.msk [vmem:[%s4 + $0x48] sm:$0xf] %vm480, %v434
    %500 = vst.msk [vmem:[%s4 + $0x4c] sm:$0xf] %vm480, %v435
    %501 = vst.msk [vmem:[%s4 + $0x50] sm:$0xf] %vm480, %v436
    %502 = vst.msk [vmem:[%s4 + $0x54] sm:$0xf] %vm480, %v437
    %503 = vst.msk [vmem:[%s4 + $0x58] sm:$0xf] %vm480, %v438
    %504 = vst.msk [vmem:[%s4 + $0x5c] sm:$0xf] %vm480, %v439
    %505 = vst.msk [vmem:[%s4 + $0x60] sm:$0xf] %vm480, %v440
    %506 = vst.msk [vmem:[%s4 + $0x64] sm:$0xf] %vm480, %v441
    %507 = vst.msk [vmem:[%s4 + $0x68] sm:$0xf] %vm480, %v442
    %508 = vst.msk [vmem:[%s4 + $0x6c] sm:$0xf] %vm480, %v443
    %509 = vst.msk [vmem:[%s4 + $0x70] sm:$0xf] %vm480, %v444
    %510 = vst.msk [vmem:[%s4 + $0x74] sm:$0xf] %vm480, %v445
    %511 = vst.msk [vmem:[%s4 + $0x78] sm:$0xf] %vm480, %v446
    %512 = vst.msk [vmem:[%s4 + $0x7c] sm:$0xf] %vm480, %v447
    %v513 = vld [vmem:[%s2] sm:$0xff]
    %v514 = vld [vmem:[%s2 + $0x8] sm:$0xff]
    %v515 = vld [vmem:[%s2 + $0x10] sm:$0xff]
    %v516 = vld [vmem:[%s2 + $0x18] sm:$0xff]
    %v517 = vld [vmem:[%s2 + $0x20] sm:$0xff]
    %v518 = vld [vmem:[%s2 + $0x28] sm:$0xff]
    %v519 = vld [vmem:[%s2 + $0x30] sm:$0xff]
    %v520 = vld [vmem:[%s2 + $0x38] sm:$0xff]
    %vm521 = vcmask 523264
    %v523 = vsel %vm521, %v226, 0
    %v526 = vsel %vm521, %v229, 0
    %v529 = vsel %vm521, %v234, 0
    %v532 = vsel %vm521, %v237, 0
    %v535 = vsel %vm521, %v242, 0
    %v538 = vsel %vm521, %v245, 0
    %v541 = vsel %vm521, %v250, 0
    %v544 = vsel %vm521, %v253, 0
    %v547 = vsel %vm521, %v258, 0
    %v550 = vsel %vm521, %v261, 0
    %v553 = vsel %vm521, %v266, 0
    %v556 = vsel %vm521, %v269, 0
    %v559 = vsel %vm521, %v274, 0
    %v562 = vsel %vm521, %v277, 0
    %v565 = vsel %vm521, %v282, 0
    %v568 = vsel %vm521, %v285, 0
    %v571 = vsel %vm521, %v290, 0
    %v574 = vsel %vm521, %v293, 0
    %v577 = vsel %vm521, %v298, 0
    %v580 = vsel %vm521, %v301, 0
    %v583 = vsel %vm521, %v306, 0
    %v586 = vsel %vm521, %v309, 0
    %v589 = vsel %vm521, %v314, 0
    %v592 = vsel %vm521, %v317, 0
    %v595 = vsel %vm521, %v322, 0
    %v598 = vsel %vm521, %v325, 0
    %v601 = vsel %vm521, %v330, 0
    %v604 = vsel %vm521, %v333, 0
    %v607 = vsel %vm521, %v338, 0
    %v610 = vsel %vm521, %v341, 0
    %v613 = vsel %vm521, %v346, 0
    %v616 = vsel %vm521, %v349, 0
    %618 = vmatprep.subr.mxu0 0.0
    %619 = vmatpush1.msra.mxu0 0.0
    %620 = vmatprep.subr.mxu0 0.0
    %621 = vmatpush1.msra.mxu0 0.0
    %622 = vmatprep.subr.mxu0 0.0
    %623 = vmatpush1.msra.mxu0 0.0
    %624 = vmatprep.subr.mxu0 0.0
    %625 = vmatpush1.msra.mxu0 0.0
    %626 = vmatprep.subr.mxu0 0.0
    %627 = vmatpush1.msra.mxu0 0.0
    %628 = vmatprep.subr.mxu0 0.0
    %629 = vmatpush1.msra.mxu0 0.0
    %630 = vmatprep.subr.mxu0 0.0
    %631 = vmatpush1.msra.mxu0 0.0
    %632 = vmatprep.subr.mxu0 0.0
    %633 = vmatpush1.msra.mxu0 0.0
    %634 = vmatprep.subr.mxu0 0.0
    %635 = vmatpush1.msra.mxu0 %v520
    %636 = vmatprep.subr.mxu0 0.0
    %637 = vmatpush1.msra.mxu0 %v519
    %638 = vmatprep.subr.mxu0 0.0
    %639 = vmatpush1.msra.mxu0 %v518
    %640 = vmatprep.subr.mxu0 0.0
    %641 = vmatpush1.msra.mxu0 %v517
    %642 = vmatprep.subr.mxu0 0.0
    %643 = vmatpush1.msra.mxu0 %v516
    %644 = vmatprep.subr.mxu0 0.0
    %645 = vmatpush1.msra.mxu0 %v515
    %646 = vmatprep.subr.mxu0 0.0
    %647 = vmatpush1.msra.mxu0 %v514
    %648 = vmatprep.subr.mxu0 0.0
    %649 = vmatpush1.msra.mxu0 %v513
    %650 = vmatprep.subr.mxu0 0.0
    %651 = vmatpush2.msra.mxu0 0.0
    %652 = vmatprep.subr.mxu0 0.0
    %653 = vmatpush2.msra.mxu0 0.0
    %654 = vmatprep.subr.mxu0 0.0
    %655 = vmatpush2.msra.mxu0 0.0
    %656 = vmatprep.subr.mxu0 0.0
    %657 = vmatpush2.msra.mxu0 0.0
    %658 = vmatprep.subr.mxu0 0.0
    %659 = vmatpush2.msra.mxu0 0.0
    %660 = vmatprep.subr.mxu0 0.0
    %661 = vmatpush2.msra.mxu0 0.0
    %662 = vmatprep.subr.mxu0 0.0
    %663 = vmatpush2.msra.mxu0 0.0
    %664 = vmatprep.subr.mxu0 0.0
    %665 = vmatpush2.msra.mxu0 0.0
    %666 = vmatprep.subr.mxu0 0.0
    %667 = vmatpush2.msra.mxu0 0.0
    %668 = vmatprep.subr.mxu0 0.0
    %669 = vmatpush2.msra.mxu0 0.0
    %670 = vmatprep.subr.mxu0 0.0
    %671 = vmatpush2.msra.mxu0 0.0
    %672 = vmatprep.subr.mxu0 0.0
    %673 = vmatpush2.msra.mxu0 0.0
    %674 = vmatprep.subr.mxu0 0.0
    %675 = vmatpush2.msra.mxu0 0.0
    %676 = vmatprep.subr.mxu0 0.0
    %677 = vmatpush2.msra.mxu0 0.0
    %678 = vmatprep.subr.mxu0 0.0
    %679 = vmatpush2.msra.mxu0 0.0
    %680 = vmatprep.subr.mxu0 0.0
    %681 = vmatpush2.msra.mxu0 0.0
    %682 = vmatprep.mubr.f32.mxu0 0.0
    %683 = vmatmul.mubr.f32.gmra.mxu0 %v523
    %v684 = vpop.f32.mrf.mxu0
    %v685 = vadd.f32 0.0, %v684
    %v686 = vpop.f32.mrf.mxu0
    %687 = vmatprep.mubr.f32.mxu0 0.0
    %688 = vmatmul.mubr.f32.gmra.mxu0 %v526
    %v689 = vpop.f32.mrf.mxu0
    %v690 = vadd.f32 0.0, %v689
    %v691 = vpop.f32.mrf.mxu0
    %692 = vmatprep.mubr.f32.mxu0 0.0
    %693 = vmatmul.mubr.f32.gmra.mxu0 %v529
    %v694 = vpop.f32.mrf.mxu0
    %v695 = vadd.f32 0.0, %v694
    %v696 = vpop.f32.mrf.mxu0
    %697 = vmatprep.mubr.f32.mxu0 0.0
    %698 = vmatmul.mubr.f32.gmra.mxu0 %v532
    %v699 = vpop.f32.mrf.mxu0
    %v700 = vadd.f32 0.0, %v699
    %v701 = vpop.f32.mrf.mxu0
    %702 = vmatprep.mubr.f32.mxu0 0.0
    %703 = vmatmul.mubr.f32.gmra.mxu0 %v535
    %v704 = vpop.f32.mrf.mxu0
    %v705 = vadd.f32 0.0, %v704
    %v706 = vpop.f32.mrf.mxu0
    %707 = vmatprep.mubr.f32.mxu0 0.0
    %708 = vmatmul.mubr.f32.gmra.mxu0 %v538
    %v709 = vpop.f32.mrf.mxu0
    %v710 = vadd.f32 0.0, %v709
    %v711 = vpop.f32.mrf.mxu0
    %712 = vmatprep.mubr.f32.mxu0 0.0
    %713 = vmatmul.mubr.f32.gmra.mxu0 %v541
    %v714 = vpop.f32.mrf.mxu0
    %v715 = vadd.f32 0.0, %v714
    %v716 = vpop.f32.mrf.mxu0
    %717 = vmatprep.mubr.f32.mxu0 0.0
    %718 = vmatmul.mubr.f32.gmra.mxu0 %v544
    %v719 = vpop.f32.mrf.mxu0
    %v720 = vadd.f32 0.0, %v719
    %v721 = vpop.f32.mrf.mxu0
    %722 = vmatprep.mubr.f32.mxu0 0.0
    %723 = vmatmul.mubr.f32.gmra.mxu0 %v547
    %v724 = vpop.f32.mrf.mxu0
    %v725 = vadd.f32 0.0, %v724
    %v726 = vpop.f32.mrf.mxu0
    %727 = vmatprep.mubr.f32.mxu0 0.0
    %728 = vmatmul.mubr.f32.gmra.mxu0 %v550
    %v729 = vpop.f32.mrf.mxu0
    %v730 = vadd.f32 0.0, %v729
    %v731 = vpop.f32.mrf.mxu0
    %732 = vmatprep.mubr.f32.mxu0 0.0
    %733 = vmatmul.mubr.f32.gmra.mxu0 %v553
    %v734 = vpop.f32.mrf.mxu0
    %v735 = vadd.f32 0.0, %v734
    %v736 = vpop.f32.mrf.mxu0
    %737 = vmatprep.mubr.f32.mxu0 0.0
    %738 = vmatmul.mubr.f32.gmra.mxu0 %v556
    %v739 = vpop.f32.mrf.mxu0
    %v740 = vadd.f32 0.0, %v739
    %v741 = vpop.f32.mrf.mxu0
    %742 = vmatprep.mubr.f32.mxu0 0.0
    %743 = vmatmul.mubr.f32.gmra.mxu0 %v559
    %v744 = vpop.f32.mrf.mxu0
    %v745 = vadd.f32 0.0, %v744
    %v746 = vpop.f32.mrf.mxu0
    %747 = vmatprep.mubr.f32.mxu0 0.0
    %748 = vmatmul.mubr.f32.gmra.mxu0 %v562
    %v749 = vpop.f32.mrf.mxu0
    %v750 = vadd.f32 0.0, %v749
    %v751 = vpop.f32.mrf.mxu0
    %752 = vmatprep.mubr.f32.mxu0 0.0
    %753 = vmatmul.mubr.f32.gmra.mxu0 %v565
    %v754 = vpop.f32.mrf.mxu0
    %v755 = vadd.f32 0.0, %v754
    %v756 = vpop.f32.mrf.mxu0
    %757 = vmatprep.mubr.f32.mxu0 0.0
    %758 = vmatmul.mubr.f32.gmra.mxu0 %v568
    %v759 = vpop.f32.mrf.mxu0
    %v760 = vadd.f32 0.0, %v759
    %v761 = vpop.f32.mrf.mxu0
    %762 = vmatprep.mubr.f32.mxu0 0.0
    %763 = vmatmul.mubr.f32.gmra.mxu0 %v571
    %v764 = vpop.f32.mrf.mxu0
    %v765 = vadd.f32 0.0, %v764
    %v766 = vpop.f32.mrf.mxu0
    %767 = vmatprep.mubr.f32.mxu0 0.0
    %768 = vmatmul.mubr.f32.gmra.mxu0 %v574
    %v769 = vpop.f32.mrf.mxu0
    %v770 = vadd.f32 0.0, %v769
    %v771 = vpop.f32.mrf.mxu0
    %772 = vmatprep.mubr.f32.mxu0 0.0
    %773 = vmatmul.mubr.f32.gmra.mxu0 %v577
    %v774 = vpop.f32.mrf.mxu0
    %v775 = vadd.f32 0.0, %v774
    %v776 = vpop.f32.mrf.mxu0
    %777 = vmatprep.mubr.f32.mxu0 0.0
    %778 = vmatmul.mubr.f32.gmra.mxu0 %v580
    %v779 = vpop.f32.mrf.mxu0
    %v780 = vadd.f32 0.0, %v779
    %v781 = vpop.f32.mrf.mxu0
    %782 = vmatprep.mubr.f32.mxu0 0.0
    %783 = vmatmul.mubr.f32.gmra.mxu0 %v583
    %v784 = vpop.f32.mrf.mxu0
    %v785 = vadd.f32 0.0, %v784
    %v786 = vpop.f32.mrf.mxu0
    %787 = vmatprep.mubr.f32.mxu0 0.0
    %788 = vmatmul.mubr.f32.gmra.mxu0 %v586
    %v789 = vpop.f32.mrf.mxu0
    %v790 = vadd.f32 0.0, %v789
    %v791 = vpop.f32.mrf.mxu0
    %792 = vmatprep.mubr.f32.mxu0 0.0
    %793 = vmatmul.mubr.f32.gmra.mxu0 %v589
    %v794 = vpop.f32.mrf.mxu0
    %v795 = vadd.f32 0.0, %v794
    %v796 = vpop.f32.mrf.mxu0
    %797 = vmatprep.mubr.f32.mxu0 0.0
    %798 = vmatmul.mubr.f32.gmra.mxu0 %v592
    %v799 = vpop.f32.mrf.mxu0
    %v800 = vadd.f32 0.0, %v799
    %v801 = vpop.f32.mrf.mxu0
    %802 = vmatprep.mubr.f32.mxu0 0.0
    %803 = vmatmul.mubr.f32.gmra.mxu0 %v595
    %v804 = vpop.f32.mrf.mxu0
    %v805 = vadd.f32 0.0, %v804
    %v806 = vpop.f32.mrf.mxu0
    %807 = vmatprep.mubr.f32.mxu0 0.0
    %808 = vmatmul.mubr.f32.gmra.mxu0 %v598
    %v809 = vpop.f32.mrf.mxu0
    %v810 = vadd.f32 0.0, %v809
    %v811 = vpop.f32.mrf.mxu0
    %812 = vmatprep.mubr.f32.mxu0 0.0
    %813 = vmatmul.mubr.f32.gmra.mxu0 %v601
    %v814 = vpop.f32.mrf.mxu0
    %v815 = vadd.f32 0.0, %v814
    %v816 = vpop.f32.mrf.mxu0
    %817 = vmatprep.mubr.f32.mxu0 0.0
    %818 = vmatmul.mubr.f32.gmra.mxu0 %v604
    %v819 = vpop.f32.mrf.mxu0
    %v820 = vadd.f32 0.0, %v819
    %v821 = vpop.f32.mrf.mxu0
    %822 = vmatprep.mubr.f32.mxu0 0.0
    %823 = vmatmul.mubr.f32.gmra.mxu0 %v607
    %v824 = vpop.f32.mrf.mxu0
    %v825 = vadd.f32 0.0, %v824
    %v826 = vpop.f32.mrf.mxu0
    %827 = vmatprep.mubr.f32.mxu0 0.0
    %828 = vmatmul.mubr.f32.gmra.mxu0 %v610
    %v829 = vpop.f32.mrf.mxu0
    %v830 = vadd.f32 0.0, %v829
    %v831 = vpop.f32.mrf.mxu0
    %832 = vmatprep.mubr.f32.mxu0 0.0
    %833 = vmatmul.mubr.f32.gmra.mxu0 %v613
    %v834 = vpop.f32.mrf.mxu0
    %v835 = vadd.f32 0.0, %v834
    %v836 = vpop.f32.mrf.mxu0
    %837 = vmatprep.mubr.f32.mxu0 0.0
    %838 = vmatmul.mubr.f32.gmra.mxu0 %v616
    %v839 = vpop.f32.mrf.mxu0
    %v840 = vadd.f32 0.0, %v839
    %v841 = vpop.f32.mrf.mxu0
    %842 = vdwg.mxu0
    %v843 = vld [vmem:[%s3] sm:$0xff]
    %v844 = vld [vmem:[%s3 + $0x8] sm:$0xff]
    %v845 = vld [vmem:[%s3 + $0x10] sm:$0xff]
    %v846 = vld [vmem:[%s3 + $0x18] sm:$0xff]
    %v847 = vld [vmem:[%s3 + $0x20] sm:$0xff]
    %v848 = vld [vmem:[%s3 + $0x28] sm:$0xff]
    %v849 = vld [vmem:[%s3 + $0x30] sm:$0xff]
    %v850 = vld [vmem:[%s3 + $0x38] sm:$0xff]
    %851 = vmatprep.subr.mxu0 0.0
    %852 = vmatpush1.msra.mxu0 0.0
    %853 = vmatprep.subr.mxu0 0.0
    %854 = vmatpush1.msra.mxu0 0.0
    %855 = vmatprep.subr.mxu0 0.0
    %856 = vmatpush1.msra.mxu0 0.0
    %857 = vmatprep.subr.mxu0 0.0
    %858 = vmatpush1.msra.mxu0 0.0
    %859 = vmatprep.subr.mxu0 0.0
    %860 = vmatpush1.msra.mxu0 0.0
    %861 = vmatprep.subr.mxu0 0.0
    %862 = vmatpush1.msra.mxu0 0.0
    %863 = vmatprep.subr.mxu0 0.0
    %864 = vmatpush1.msra.mxu0 0.0
    %865 = vmatprep.subr.mxu0 0.0
    %866 = vmatpush1.msra.mxu0 0.0
    %867 = vmatprep.subr.mxu0 0.0
    %868 = vmatpush1.msra.mxu0 %v850
    %869 = vmatprep.subr.mxu0 0.0
    %870 = vmatpush1.msra.mxu0 %v849
    %871 = vmatprep.subr.mxu0 0.0
    %872 = vmatpush1.msra.mxu0 %v848
    %873 = vmatprep.subr.mxu0 0.0
    %874 = vmatpush1.msra.mxu0 %v847
    %875 = vmatprep.subr.mxu0 0.0
    %876 = vmatpush1.msra.mxu0 %v846
    %877 = vmatprep.subr.mxu0 0.0
    %878 = vmatpush1.msra.mxu0 %v845
    %879 = vmatprep.subr.mxu0 0.0
    %880 = vmatpush1.msra.mxu0 %v844
    %881 = vmatprep.subr.mxu0 0.0
    %882 = vmatpush1.msra.mxu0 %v843
    %883 = vmatprep.subr.mxu0 0.0
    %884 = vmatpush2.msra.mxu0 0.0
    %885 = vmatprep.subr.mxu0 0.0
    %886 = vmatpush2.msra.mxu0 0.0
    %887 = vmatprep.subr.mxu0 0.0
    %888 = vmatpush2.msra.mxu0 0.0
    %889 = vmatprep.subr.mxu0 0.0
    %890 = vmatpush2.msra.mxu0 0.0
    %891 = vmatprep.subr.mxu0 0.0
    %892 = vmatpush2.msra.mxu0 0.0
    %893 = vmatprep.subr.mxu0 0.0
    %894 = vmatpush2.msra.mxu0 0.0
    %895 = vmatprep.subr.mxu0 0.0
    %896 = vmatpush2.msra.mxu0 0.0
    %897 = vmatprep.subr.mxu0 0.0
    %898 = vmatpush2.msra.mxu0 0.0
    %899 = vmatprep.subr.mxu0 0.0
    %900 = vmatpush2.msra.mxu0 0.0
    %901 = vmatprep.subr.mxu0 0.0
    %902 = vmatpush2.msra.mxu0 0.0
    %903 = vmatprep.subr.mxu0 0.0
    %904 = vmatpush2.msra.mxu0 0.0
    %905 = vmatprep.subr.mxu0 0.0
    %906 = vmatpush2.msra.mxu0 0.0
    %907 = vmatprep.subr.mxu0 0.0
    %908 = vmatpush2.msra.mxu0 0.0
    %909 = vmatprep.subr.mxu0 0.0
    %910 = vmatpush2.msra.mxu0 0.0
    %911 = vmatprep.subr.mxu0 0.0
    %912 = vmatpush2.msra.mxu0 0.0
    %913 = vmatprep.subr.mxu0 0.0
    %914 = vmatpush2.msra.mxu0 0.0
    %915 = vmatprep.mubr.f32.mxu0 0.0
    %916 = vmatmul.mubr.f32.gmra.mxu0 %v523
    %v917 = vpop.f32.mrf.mxu0
    %v918 = vadd.f32 0.0, %v917
    %v919 = vpop.f32.mrf.mxu0
    %920 = vmatprep.mubr.f32.mxu0 0.0
    %921 = vmatmul.mubr.f32.gmra.mxu0 %v526
    %v922 = vpop.f32.mrf.mxu0
    %v923 = vadd.f32 0.0, %v922
    %v924 = vpop.f32.mrf.mxu0
    %925 = vmatprep.mubr.f32.mxu0 0.0
    %926 = vmatmul.mubr.f32.gmra.mxu0 %v529
    %v927 = vpop.f32.mrf.mxu0
    %v928 = vadd.f32 0.0, %v927
    %v929 = vpop.f32.mrf.mxu0
    %930 = vmatprep.mubr.f32.mxu0 0.0
    %931 = vmatmul.mubr.f32.gmra.mxu0 %v532
    %v932 = vpop.f32.mrf.mxu0
    %v933 = vadd.f32 0.0, %v932
    %v934 = vpop.f32.mrf.mxu0
    %935 = vmatprep.mubr.f32.mxu0 0.0
    %936 = vmatmul.mubr.f32.gmra.mxu0 %v535
    %v937 = vpop.f32.mrf.mxu0
    %v938 = vadd.f32 0.0, %v937
    %v939 = vpop.f32.mrf.mxu0
    %940 = vmatprep.mubr.f32.mxu0 0.0
    %941 = vmatmul.mubr.f32.gmra.mxu0 %v538
    %v942 = vpop.f32.mrf.mxu0
    %v943 = vadd.f32 0.0, %v942
    %v944 = vpop.f32.mrf.mxu0
    %945 = vmatprep.mubr.f32.mxu0 0.0
    %946 = vmatmul.mubr.f32.gmra.mxu0 %v541
    %v947 = vpop.f32.mrf.mxu0
    %v948 = vadd.f32 0.0, %v947
    %v949 = vpop.f32.mrf.mxu0
    %950 = vmatprep.mubr.f32.mxu0 0.0
    %951 = vmatmul.mubr.f32.gmra.mxu0 %v544
    %v952 = vpop.f32.mrf.mxu0
    %v953 = vadd.f32 0.0, %v952
    %v954 = vpop.f32.mrf.mxu0
    %955 = vmatprep.mubr.f32.mxu0 0.0
    %956 = vmatmul.mubr.f32.gmra.mxu0 %v547
    %v957 = vpop.f32.mrf.mxu0
    %v958 = vadd.f32 0.0, %v957
    %v959 = vpop.f32.mrf.mxu0
    %960 = vmatprep.mubr.f32.mxu0 0.0
    %961 = vmatmul.mubr.f32.gmra.mxu0 %v550
    %v962 = vpop.f32.mrf.mxu0
    %v963 = vadd.f32 0.0, %v962
    %v964 = vpop.f32.mrf.mxu0
    %965 = vmatprep.mubr.f32.mxu0 0.0
    %966 = vmatmul.mubr.f32.gmra.mxu0 %v553
    %v967 = vpop.f32.mrf.mxu0
    %v968 = vadd.f32 0.0, %v967
    %v969 = vpop.f32.mrf.mxu0
    %970 = vmatprep.mubr.f32.mxu0 0.0
    %971 = vmatmul.mubr.f32.gmra.mxu0 %v556
    %v972 = vpop.f32.mrf.mxu0
    %v973 = vadd.f32 0.0, %v972
    %v974 = vpop.f32.mrf.mxu0
    %975 = vmatprep.mubr.f32.mxu0 0.0
    %976 = vmatmul.mubr.f32.gmra.mxu0 %v559
    %v977 = vpop.f32.mrf.mxu0
    %v978 = vadd.f32 0.0, %v977
    %v979 = vpop.f32.mrf.mxu0
    %980 = vmatprep.mubr.f32.mxu0 0.0
    %981 = vmatmul.mubr.f32.gmra.mxu0 %v562
    %v982 = vpop.f32.mrf.mxu0
    %v983 = vadd.f32 0.0, %v982
    %v984 = vpop.f32.mrf.mxu0
    %985 = vmatprep.mubr.f32.mxu0 0.0
    %986 = vmatmul.mubr.f32.gmra.mxu0 %v565
    %v987 = vpop.f32.mrf.mxu0
    %v988 = vadd.f32 0.0, %v987
    %v989 = vpop.f32.mrf.mxu0
    %990 = vmatprep.mubr.f32.mxu0 0.0
    %991 = vmatmul.mubr.f32.gmra.mxu0 %v568
    %v992 = vpop.f32.mrf.mxu0
    %v993 = vadd.f32 0.0, %v992
    %v994 = vpop.f32.mrf.mxu0
    %995 = vmatprep.mubr.f32.mxu0 0.0
    %996 = vmatmul.mubr.f32.gmra.mxu0 %v571
    %v997 = vpop.f32.mrf.mxu0
    %v998 = vadd.f32 0.0, %v997
    %v999 = vpop.f32.mrf.mxu0
    %1000 = vmatprep.mubr.f32.mxu0 0.0
    %1001 = vmatmul.mubr.f32.gmra.mxu0 %v574
    %v1002 = vpop.f32.mrf.mxu0
    %v1003 = vadd.f32 0.0, %v1002
    %v1004 = vpop.f32.mrf.mxu0
    %1005 = vmatprep.mubr.f32.mxu0 0.0
    %1006 = vmatmul.mubr.f32.gmra.mxu0 %v577
    %v1007 = vpop.f32.mrf.mxu0
    %v1008 = vadd.f32 0.0, %v1007
    %v1009 = vpop.f32.mrf.mxu0
    %1010 = vmatprep.mubr.f32.mxu0 0.0
    %1011 = vmatmul.mubr.f32.gmra.mxu0 %v580
    %v1012 = vpop.f32.mrf.mxu0
    %v1013 = vadd.f32 0.0, %v1012
    %v1014 = vpop.f32.mrf.mxu0
    %1015 = vmatprep.mubr.f32.mxu0 0.0
    %1016 = vmatmul.mubr.f32.gmra.mxu0 %v583
    %v1017 = vpop.f32.mrf.mxu0
    %v1018 = vadd.f32 0.0, %v1017
    %v1019 = vpop.f32.mrf.mxu0
    %1020 = vmatprep.mubr.f32.mxu0 0.0
    %1021 = vmatmul.mubr.f32.gmra.mxu0 %v586
    %v1022 = vpop.f32.mrf.mxu0
    %v1023 = vadd.f32 0.0, %v1022
    %v1024 = vpop.f32.mrf.mxu0
    %1025 = vmatprep.mubr.f32.mxu0 0.0
    %1026 = vmatmul.mubr.f32.gmra.mxu0 %v589
    %v1027 = vpop.f32.mrf.mxu0
    %v1028 = vadd.f32 0.0, %v1027
    %v1029 = vpop.f32.mrf.mxu0
    %1030 = vmatprep.mubr.f32.mxu0 0.0
    %1031 = vmatmul.mubr.f32.gmra.mxu0 %v592
    %v1032 = vpop.f32.mrf.mxu0
    %v1033 = vadd.f32 0.0, %v1032
    %v1034 = vpop.f32.mrf.mxu0
    %1035 = vmatprep.mubr.f32.mxu0 0.0
    %1036 = vmatmul.mubr.f32.gmra.mxu0 %v595
    %v1037 = vpop.f32.mrf.mxu0
    %v1038 = vadd.f32 0.0, %v1037
    %v1039 = vpop.f32.mrf.mxu0
    %1040 = vmatprep.mubr.f32.mxu0 0.0
    %1041 = vmatmul.mubr.f32.gmra.mxu0 %v598
    %v1042 = vpop.f32.mrf.mxu0
    %v1043 = vadd.f32 0.0, %v1042
    %v1044 = vpop.f32.mrf.mxu0
    %1045 = vmatprep.mubr.f32.mxu0 0.0
    %1046 = vmatmul.mubr.f32.gmra.mxu0 %v601
    %v1047 = vpop.f32.mrf.mxu0
    %v1048 = vadd.f32 0.0, %v1047
    %v1049 = vpop.f32.mrf.mxu0
    %1050 = vmatprep.mubr.f32.mxu0 0.0
    %1051 = vmatmul.mubr.f32.gmra.mxu0 %v604
    %v1052 = vpop.f32.mrf.mxu0
    %v1053 = vadd.f32 0.0, %v1052
    %v1054 = vpop.f32.mrf.mxu0
    %1055 = vmatprep.mubr.f32.mxu0 0.0
    %1056 = vmatmul.mubr.f32.gmra.mxu0 %v607
    %v1057 = vpop.f32.mrf.mxu0
    %v1058 = vadd.f32 0.0, %v1057
    %v1059 = vpop.f32.mrf.mxu0
    %1060 = vmatprep.mubr.f32.mxu0 0.0
    %1061 = vmatmul.mubr.f32.gmra.mxu0 %v610
    %v1062 = vpop.f32.mrf.mxu0
    %v1063 = vadd.f32 0.0, %v1062
    %v1064 = vpop.f32.mrf.mxu0
    %1065 = vmatprep.mubr.f32.mxu0 0.0
    %1066 = vmatmul.mubr.f32.gmra.mxu0 %v613
    %v1067 = vpop.f32.mrf.mxu0
    %v1068 = vadd.f32 0.0, %v1067
    %v1069 = vpop.f32.mrf.mxu0
    %1070 = vmatprep.mubr.f32.mxu0 0.0
    %1071 = vmatmul.mubr.f32.gmra.mxu0 %v616
    %v1072 = vpop.f32.mrf.mxu0
    %v1073 = vadd.f32 0.0, %v1072
    %v1074 = vpop.f32.mrf.mxu0
    %1075 = vdwg.mxu0
    %1076 = vxpose.xlu0.b32.start [1/16] %v685, 128
    %1077 = vxpose.xlu0.b32.cont [2/16] %v690, 128
    %1078 = vxpose.xlu0.b32.cont [3/16] %v695, 128
    %1079 = vxpose.xlu0.b32.cont [4/16] %v700, 128
    %1080 = vxpose.xlu0.b32.cont [5/16] %v705, 128
    %1081 = vxpose.xlu0.b32.cont [6/16] %v710, 128
    %1082 = vxpose.xlu0.b32.cont [7/16] %v715, 128
    %1083 = vxpose.xlu0.b32.cont [8/16] %v720, 128
    %1084 = vxpose.xlu0.b32.cont [9/16] %v725, 128
    %1085 = vxpose.xlu0.b32.cont [10/16] %v730, 128
    %1086 = vxpose.xlu0.b32.cont [11/16] %v735, 128
    %1087 = vxpose.xlu0.b32.cont [12/16] %v740, 128
    %1088 = vxpose.xlu0.b32.cont [13/16] %v745, 128
    %1089 = vxpose.xlu0.b32.cont [14/16] %v750, 128
    %1090 = vxpose.xlu0.b32.cont [15/16] %v755, 128
    %1091 = vxpose.xlu0.b32.end [16/16] %v760, 128
    %v1092 = vpop.trf.xlu0
    %v1093 = vpop.trf.xlu0
    %v1094 = vpop.trf.xlu0
    %v1095 = vpop.trf.xlu0
    %v1096 = vpop.trf.xlu0
    %v1097 = vpop.trf.xlu0
    %v1098 = vpop.trf.xlu0
    %v1099 = vpop.trf.xlu0
    %v1100 = vpop.trf.xlu0
    %v1101 = vpop.trf.xlu0
    %v1102 = vpop.trf.xlu0
    %v1103 = vpop.trf.xlu0
    %v1104 = vpop.trf.xlu0
    %v1105 = vpop.trf.xlu0
    %v1106 = vpop.trf.xlu0
    %v1107 = vpop.trf.xlu0
    %1108 = vxpose.xlu0.b32.start [1/16] %v765, 128
    %1109 = vxpose.xlu0.b32.cont [2/16] %v770, 128
    %1110 = vxpose.xlu0.b32.cont [3/16] %v775, 128
    %1111 = vxpose.xlu0.b32.cont [4/16] %v780, 128
    %1112 = vxpose.xlu0.b32.cont [5/16] %v785, 128
    %1113 = vxpose.xlu0.b32.cont [6/16] %v790, 128
    %1114 = vxpose.xlu0.b32.cont [7/16] %v795, 128
    %1115 = vxpose.xlu0.b32.cont [8/16] %v800, 128
    %1116 = vxpose.xlu0.b32.cont [9/16] %v805, 128
    %1117 = vxpose.xlu0.b32.cont [10/16] %v810, 128
    %1118 = vxpose.xlu0.b32.cont [11/16] %v815, 128
    %1119 = vxpose.xlu0.b32.cont [12/16] %v820, 128
    %1120 = vxpose.xlu0.b32.cont [13/16] %v825, 128
    %1121 = vxpose.xlu0.b32.cont [14/16] %v830, 128
    %1122 = vxpose.xlu0.b32.cont [15/16] %v835, 128
    %1123 = vxpose.xlu0.b32.end [16/16] %v840, 128
    %v1124 = vpop.trf.xlu0
    %v1125 = vpop.trf.xlu0
    %v1126 = vpop.trf.xlu0
    %v1127 = vpop.trf.xlu0
    %v1128 = vpop.trf.xlu0
    %v1129 = vpop.trf.xlu0
    %v1130 = vpop.trf.xlu0
    %v1131 = vpop.trf.xlu0
    %v1132 = vpop.trf.xlu0
    %v1133 = vpop.trf.xlu0
    %v1134 = vpop.trf.xlu0
    %v1135 = vpop.trf.xlu0
    %v1136 = vpop.trf.xlu0
    %v1137 = vpop.trf.xlu0
    %v1138 = vpop.trf.xlu0
    %v1139 = vpop.trf.xlu0
    %1140 = vst [vmem:[#allocation2] sm:$0xff] %v1092
    %1141 = vst [vmem:[#allocation2 + $0x8] sm:$0xff] %v1124
    %vm1142 = vcmask 64512
    %1143 = vst.msk [vmem:[%s6] sm:$0xff] %vm1142, %v918
    %1144 = vst.msk [vmem:[%s6 + $0x8] sm:$0xff] %vm1142, %v923
    %1145 = vst.msk [vmem:[%s6 + $0x10] sm:$0xff] %vm1142, %v928
    %1146 = vst.msk [vmem:[%s6 + $0x18] sm:$0xff] %vm1142, %v933
    %1147 = vst.msk [vmem:[%s6 + $0x20] sm:$0xff] %vm1142, %v938
    %1148 = vst.msk [vmem:[%s6 + $0x28] sm:$0xff] %vm1142, %v943
    %1149 = vst.msk [vmem:[%s6 + $0x30] sm:$0xff] %vm1142, %v948
    %1150 = vst.msk [vmem:[%s6 + $0x38] sm:$0xff] %vm1142, %v953
    %1151 = vst.msk [vmem:[%s6 + $0x40] sm:$0xff] %vm1142, %v958
    %1152 = vst.msk [vmem:[%s6 + $0x48] sm:$0xff] %vm1142, %v963
    %1153 = vst.msk [vmem:[%s6 + $0x50] sm:$0xff] %vm1142, %v968
    %1154 = vst.msk [vmem:[%s6 + $0x58] sm:$0xff] %vm1142, %v973
    %1155 = vst.msk [vmem:[%s6 + $0x60] sm:$0xff] %vm1142, %v978
    %1156 = vst.msk [vmem:[%s6 + $0x68] sm:$0xff] %vm1142, %v983
    %1157 = vst.msk [vmem:[%s6 + $0x70] sm:$0xff] %vm1142, %v988
    %1158 = vst.msk [vmem:[%s6 + $0x78] sm:$0xff] %vm1142, %v993
    %1159 = vst.msk [vmem:[%s6 + $0x80] sm:$0xff] %vm1142, %v998
    %1160 = vst.msk [vmem:[%s6 + $0x88] sm:$0xff] %vm1142, %v1003
    %1161 = vst.msk [vmem:[%s6 + $0x90] sm:$0xff] %vm1142, %v1008
    %1162 = vst.msk [vmem:[%s6 + $0x98] sm:$0xff] %vm1142, %v1013
    %1163 = vst.msk [vmem:[%s6 + $0xa0] sm:$0xff] %vm1142, %v1018
    %1164 = vst.msk [vmem:[%s6 + $0xa8] sm:$0xff] %vm1142, %v1023
    %1165 = vst.msk [vmem:[%s6 + $0xb0] sm:$0xff] %vm1142, %v1028
    %1166 = vst.msk [vmem:[%s6 + $0xb8] sm:$0xff] %vm1142, %v1033
    %1167 = vst.msk [vmem:[%s6 + $0xc0] sm:$0xff] %vm1142, %v1038
    %1168 = vst.msk [vmem:[%s6 + $0xc8] sm:$0xff] %vm1142, %v1043
    %1169 = vst.msk [vmem:[%s6 + $0xd0] sm:$0xff] %vm1142, %v1048
    %1170 = vst.msk [vmem:[%s6 + $0xd8] sm:$0xff] %vm1142, %v1053
    %1171 = vst.msk [vmem:[%s6 + $0xe0] sm:$0xff] %vm1142, %v1058
    %1172 = vst.msk [vmem:[%s6 + $0xe8] sm:$0xff] %vm1142, %v1063
    %1173 = vst.msk [vmem:[%s6 + $0xf0] sm:$0xff] %vm1142, %v1068
    %1174 = vst.msk [vmem:[%s6 + $0xf8] sm:$0xff] %vm1142, %v1073
    // Predicated region
    $region18: #{tpu_custom_call.1} parent=1 // pred_check
      _
    $region19: #{tpu_custom_call.1} parent=1 // pred_check_branch
      %1176 = sbr.rel (0) target = $region21
    $region20: #{tpu_custom_call.1} parent=1 // pred_region
      _
    $region21: #{tpu_custom_call.1} parent=1 // pred_fallthru
      _
    // Predicated region
    $region22: #{tpu_custom_call.1} parent=1 // pred_check
      _
    $region23: #{tpu_custom_call.1} parent=1 // pred_check_branch
      %1178 = sbr.rel (0) target = $region25
    $region24: #{tpu_custom_call.1} parent=1 // pred_region
      %s1180 = ssub.s32 256, 256
      %1181 = vsyncadd [#allocation3], %s1180
      %s1183 = sshll.u32 [#allocation2], 4
      %s1184 = int_to_ptr.vmem [resolvable:$true] %s1183
      %1186 = dma.vmem_to_hbm [thread:$0]  %s1184, 256, %s5, [#allocation3]
    $region25: #{tpu_custom_call.1} parent=1 // pred_fallthru
      _
    // Predicated region
    $region26: #{tpu_custom_call.1} parent=1 // pred_check
      _
    $region27: #{tpu_custom_call.1} parent=1 // pred_check_branch
      %1188 = sbr.rel (0) target = $region29
    $region28: #{tpu_custom_call.1} parent=1 // pred_region
      _
    $region29: #{tpu_custom_call.1} parent=1 // pred_fallthru
      _
    // Predicated region
    $region30: #{tpu_custom_call.1} parent=1 // pred_check
      _
    $region31: #{tpu_custom_call.1} parent=1 // pred_check_branch
      %1190 = sbr.rel (0) target = $region33
    $region32: #{tpu_custom_call.1} parent=1 // pred_region
      _
    $region33: #{tpu_custom_call.1} parent=1 // pred_fallthru
      _
    // Predicated region
    $region34: #{tpu_custom_call.1} parent=1 // pred_check
      _
    $region35: #{tpu_custom_call.1} parent=1 // pred_check_branch
      %1192 = sbr.rel (0) target = $region37
    $region36: #{tpu_custom_call.1} parent=1 // pred_region
      %1193 = dma.done [#allocation3], 256
    $region37: #{tpu_custom_call.1} parent=1 // pred_fallthru
      _
    // Predicated region
    $region38: #{tpu_custom_call.1} parent=1 // pred_check
      _
    $region39: #{tpu_custom_call.1} parent=1 // pred_check_branch
      %1195 = sbr.rel (0) target = $region41
    $region40: #{tpu_custom_call.1} parent=1 // pred_region
      _
    $region41: #{tpu_custom_call.1} parent=1 // pred_fallthru
      _
    %1196 = vsyncpa [#allocation3], 1

</llo_original>
